<compile_context>
chip_gen: v5e
topology: v5e:2x2
jax: 0.10.0
libtpu: 0.0.40
codegen_flags: <defaults>
</compile_context>

<pallas_src>
import functools

import jax
import jax.numpy as jnp
from jax.experimental import pallas as pl
from jax.experimental.pallas import tpu as pltpu

HIDDEN = 64
FUSED_H = 2 * HIDDEN        # 128: [policy hidden | value hidden], lane-dense
OUT_LANES = 128             # lane-dense output slab width (logits | value | pad)
DEFAULT_TILE_B = 2048       # big tiles amortize per-grid-step overhead
MIN_SPLIT_BATCH = 512       # above this, force >= 2 grid steps (v7x: 2 TCs)


def _round_up(x, m):
    return (x + m - 1) // m * m


def actor_critic_kernel(x_ref, w_ref, b_ref, o_ref, *, d_in):
    """Fused two-headed MLP forward.

    x_ref : (TILE_B, d_in)          f32 activations
    w_ref : (d_in + 256, 128)       bf16 packed weights [W1 ; W2_blockdiag ; W3]
    b_ref : (3, 128)                f32 packed biases   [b1 ; b2 ; b3]
    o_ref : (TILE_B, 128)           bf16 lane-dense output slab
    """
    x = x_ref[...].astype(jnp.bfloat16)

    w1 = w_ref[0:d_in, :]
    w2 = w_ref[d_in:d_in + FUSED_H, :]
    w3 = w_ref[d_in + FUSED_H:d_in + 2 * FUSED_H, :]

    # Layer 1: one 128-lane-dense matmul covers both heads.
    h = jnp.dot(x, w1, preferred_element_type=jnp.float32) + b_ref[0:1, :]
    h = jnp.maximum(h, 0.0)

    # Layer 2: block-diagonal fused weight keeps the two heads independent.
    h = jnp.dot(h.astype(jnp.bfloat16), w2,
                preferred_element_type=jnp.float32) + b_ref[1:2, :]
    h = jnp.maximum(h, 0.0)

    # Layer 3: logits land in lanes [0, output_dim), value in lane output_dim,
    # remaining lanes are zero-padding.  One unmasked full-lane store.
    out = jnp.dot(h.astype(jnp.bfloat16), w3,
                  preferred_element_type=jnp.float32) + b_ref[2:3, :]
    o_ref[...] = out.astype(o_ref.dtype)


def pack_params(p, input_dim, output_dim):
    """Pack the 12 per-layer tensors into one bf16 weight slab + one f32 bias slab."""
    assert output_dim + 1 <= OUT_LANES, "output_dim must fit the 128-lane slab"
    d_in = _round_up(input_dim, 16)   # sublane-aligned for bf16 (16,128) tiles

    w1 = jnp.zeros((d_in, FUSED_H), jnp.float32)
    w1 = w1.at[:input_dim, :HIDDEN].set(p["pw1"])
    w1 = w1.at[:input_dim, HIDDEN:].set(p["vw1"])

    w2 = jnp.zeros((FUSED_H, FUSED_H), jnp.float32)
    w2 = w2.at[:HIDDEN, :HIDDEN].set(p["pw2"])
    w2 = w2.at[HIDDEN:, HIDDEN:].set(p["vw2"])

    w3 = jnp.zeros((FUSED_H, OUT_LANES), jnp.float32)
    w3 = w3.at[:HIDDEN, :output_dim].set(p["pw3"])
    w3 = w3.at[HIDDEN:, output_dim:output_dim + 1].set(p["vw3"])

    w_slab = jnp.concatenate([w1, w2, w3], axis=0).astype(jnp.bfloat16)

    b_slab = jnp.zeros((3, OUT_LANES), jnp.float32)
    b_slab = b_slab.at[0, :HIDDEN].set(p["pb1"][0])
    b_slab = b_slab.at[0, HIDDEN:].set(p["vb1"][0])
    b_slab = b_slab.at[1, :HIDDEN].set(p["pb2"][0])
    b_slab = b_slab.at[1, HIDDEN:].set(p["vb2"][0])
    b_slab = b_slab.at[2, :output_dim].set(p["pb3"][0])
    b_slab = b_slab.at[2, output_dim].set(p["vb3"][0, 0])

    return w_slab, b_slab


def _pick_tile_b(batch, tile_b):
    # Small batches: collapse to a single tile, rounded to bf16 sublane packing.
    tile = min(tile_b, _round_up(batch, 16))
    # Large batches: keep >= 2 grid steps so dimension_semantics=("parallel",)
    # can shard the batch across v7x's two TensorCores.
    if batch >= MIN_SPLIT_BATCH:
        tile = min(tile, _round_up(pl.cdiv(batch, 2), 16))
    return max(tile, 16)


def actor_critic_forward_slab(state, w_slab, b_slab, *, tile_b=DEFAULT_TILE_B):
    """Return the raw (batch, 128) bf16 output slab: [logits | value | zero pad].

    Fused consumers should read this slab directly (avoids an extra HBM pass
    for slicing the two heads apart).
    """
    batch, input_dim = state.shape
    d_in = w_slab.shape[0] - 2 * FUSED_H

    x = state.astype(jnp.float32)
    # Only the feature dim is padded (matches W1's zero rows).  The batch dim
    # stays ragged; Pallas handles the partial last block, so there is no
    # full-tensor jnp.pad pass through HBM.
    if input_dim < d_in:
        x = jnp.pad(x, ((0, 0), (0, d_in - input_dim)))

    tile = _pick_tile_b(batch, tile_b)
    grid = (pl.cdiv(batch, tile),)

    kernel = functools.partial(actor_critic_kernel, d_in=d_in)
    return pl.pallas_call(
        kernel,
        out_shape=jax.ShapeDtypeStruct((batch, OUT_LANES), jnp.bfloat16),
        grid=grid,
        in_specs=[
            pl.BlockSpec((tile, d_in), lambda i: (i, 0)),    # activations
            pl.BlockSpec(w_slab.shape, lambda i: (0, 0)),    # packed weights (VMEM-resident)
            pl.BlockSpec(b_slab.shape, lambda i: (0, 0)),    # packed biases
        ],
        out_specs=pl.BlockSpec((tile, OUT_LANES), lambda i: (i, 0)),
        compiler_params=pltpu.CompilerParams(
            # Shards the batch grid across v7x's two TensorCores.
            dimension_semantics=("parallel",),
            # VMEM budget at tile=2048, small d_in: ~0.5 MiB in (x2 buffers),
            # ~0.5 MiB bf16 out (x2), ~3 MiB f32 temporaries, ~70 KiB weights
            # -> well under 32 MiB on v5e / v6e / v7x (64 MiB physical).
            vmem_limit_bytes=32 * 1024 * 1024,
        ),
    )(x, w_slab, b_slab)


def split_slab(slab, output_dim):
    """Slice logits / value out of the lane-dense slab (single narrow slice)."""
    head = slab[:, :output_dim + 1].astype(jnp.float32)
    return head[:, :output_dim], head[:, output_dim:output_dim + 1]


def actor_critic_forward(state, w_slab, b_slab, output_dim, *,
                         tile_b=DEFAULT_TILE_B):
    """state: (B, input_dim) f32.  Returns (logits (B, output_dim), value (B, 1))."""
    slab = actor_critic_forward_slab(state, w_slab, b_slab, tile_b=tile_b)
    return split_slab(slab, output_dim)


def init_params(key, input_dim, output_dim, hidden=HIDDEN):
    """PyTorch-style uniform init.  Weights stored as (in, out); biases as (1, out)."""
    def linear(k, fan_in, fan_out):
        kw, kb = jax.random.split(k)
        bound = 1.0 / jnp.sqrt(fan_in)
        w = jax.random.uniform(kw, (fan_in, fan_out), jnp.float32, -bound, bound)
        b = jax.random.uniform(kb, (1, fan_out), jnp.float32, -bound, bound)
        return w, b

    keys = jax.random.split(key, 6)
    pw1, pb1 = linear(keys[0], input_dim, hidden)
    pw2, pb2 = linear(keys[1], hidden, hidden)
    pw3, pb3 = linear(keys[2], hidden, output_dim)
    vw1, vb1 = linear(keys[3], input_dim, hidden)
    vw2, vb2 = linear(keys[4], hidden, hidden)
    vw3, vb3 = linear(keys[5], hidden, 1)
    return dict(
        pw1=pw1, pb1=pb1, pw2=pw2, pb2=pb2, pw3=pw3, pb3=pb3,
        vw1=vw1, vb1=vb1, vw2=vw2, vb2=vb2, vw3=vw3, vb3=vb3,
    )


def reference_forward(state, p):
    """Pure-JAX f32 reference of the PyTorch forward pass."""
    h = jax.nn.relu(state @ p["pw1"] + p["pb1"])
    h = jax.nn.relu(h @ p["pw2"] + p["pb2"])
    logits = h @ p["pw3"] + p["pb3"]
    v = jax.nn.relu(state @ p["vw1"] + p["vb1"])
    v = jax.nn.relu(v @ p["vw2"] + p["vb2"])
    value = v @ p["vw3"] + p["vb3"]
    return logits, value


if __name__ == "__main__":
    key = jax.random.PRNGKey(0)
    k_params, k_state = jax.random.split(key)

    input_dim, output_dim = 16, 6
    params = init_params(k_params, input_dim, output_dim)
    w_slab, b_slab = pack_params(params, input_dim, output_dim)

    # Case 1: tiny batch, single grid step.
    batch = 8
    state = jax.random.normal(k_state, (batch, input_dim), jnp.float32)
    logits, value = actor_critic_forward(state, w_slab, b_slab, output_dim)
    jax.block_until_ready((logits, value))

    ref_logits, ref_value = reference_forward(state, params)
    assert logits.shape == (batch, output_dim)
    assert value.shape == (batch, 1)
    # bf16 MXU weights/activations + bf16 output slab (f32 accumulation/bias),
    # so compare against the f32 reference with a loosened tolerance.
    assert jnp.allclose(logits, ref_logits, atol=5e-2, rtol=5e-2), (
        jnp.max(jnp.abs(logits - ref_logits)))
    assert jnp.allclose(value, ref_value, atol=5e-2, rtol=5e-2), (
        jnp.max(jnp.abs(value - ref_value)))

    # Case 2: multi-step grid with a ragged last block (pad-free batch path).
    batch2 = 40
    state2 = jax.random.normal(jax.random.PRNGKey(1), (batch2, input_dim),
                               jnp.float32)
    logits2, value2 = actor_critic_forward(state2, w_slab, b_slab, output_dim,
                                           tile_b=16)
    jax.block_until_ready((logits2, value2))

    ref_logits2, ref_value2 = reference_forward(state2, params)
    assert logits2.shape == (batch2, output_dim)
    assert value2.shape == (batch2, 1)
    assert jnp.allclose(logits2, ref_logits2, atol=5e-2, rtol=5e-2), (
        jnp.max(jnp.abs(logits2 - ref_logits2)))
    assert jnp.allclose(value2, ref_value2, atol=5e-2, rtol=5e-2), (
        jnp.max(jnp.abs(value2 - ref_value2)))

    print("KERNEL_OK")
</pallas_src>

<mosaic_0001>
module attributes {stable_mosaic.version = 11 : i64} {
  func.func @actor_critic_kernel(%arg0: i32, %arg1: memref<16x16xf32, #tpu.memory_space<vmem>>, %arg2: memref<272x128xbf16, #tpu.memory_space<vmem>>, %arg3: memref<3x128xf32, #tpu.memory_space<vmem>>, %arg4: memref<16x128xbf16, #tpu.memory_space<vmem>>) attributes {dimension_semantics = [#tpu.dimension_semantics<parallel>], iteration_bounds = array<i64: 1>, scalar_prefetch = 0 : i64, scratch_operands = 0 : i64, tpu.core_type = #tpu.core_type<tc>, window_params = [{transform_indices = @transform_0, window_bounds = array<i64: 16, 16>}, {pipeline_mode = #tpu.pipeline_mode<synchronous>, transform_indices = @transform_1, window_bounds = array<i64: 272, 128>}, {pipeline_mode = #tpu.pipeline_mode<synchronous>, transform_indices = @transform_2, window_bounds = array<i64: 3, 128>}, {transform_indices = @transform_3, window_bounds = array<i64: 16, 128>}]} {
    %c0 = arith.constant 0 : index
    %c0_0 = arith.constant 0 : index
    %0 = vector.load %arg1[%c0, %c0_0] : memref<16x16xf32, #tpu.memory_space<vmem>>, vector<16x16xf32>
    %1 = arith.truncf %0 : vector<16x16xf32> to vector<16x16xbf16>
    %c0_1 = arith.constant 0 : index
    %c0_2 = arith.constant 0 : index
    %2 = vector.load %arg2[%c0_1, %c0_2] : memref<272x128xbf16, #tpu.memory_space<vmem>>, vector<16x128xbf16>
    %c16 = arith.constant 16 : index
    %c0_3 = arith.constant 0 : index
    %3 = vector.load %arg2[%c16, %c0_3] : memref<272x128xbf16, #tpu.memory_space<vmem>>, vector<128x128xbf16>
    %c144 = arith.constant 144 : index
    %c0_4 = arith.constant 0 : index
    %4 = vector.load %arg2[%c144, %c0_4] : memref<272x128xbf16, #tpu.memory_space<vmem>>, vector<128x128xbf16>
    %cst = arith.constant dense<0.000000e+00> : vector<16x128xf32>
    %5 = tpu.matmul %1, %2, %cst {dimension_numbers = #tpu.dot_dimension_numbers<[1], [0], [0], [1], [0, 0, 1, 1], [], []>} : vector<16x16xbf16>, vector<16x128xbf16>, vector<16x128xf32> -> vector<16x128xf32>
    %c0_5 = arith.constant 0 : index
    %c0_6 = arith.constant 0 : index
    %6 = vector.load %arg3[%c0_5, %c0_6] : memref<3x128xf32, #tpu.memory_space<vmem>>, vector<1x128xf32>
    %7 = vector.broadcast %6 : vector<1x128xf32> to vector<16x128xf32>
    %8 = arith.addf %5, %7 : vector<16x128xf32>
    %cst_7 = arith.constant 0.000000e+00 : f32
    %9 = vector.broadcast %cst_7 : f32 to vector<16x128xf32>
    %10 = arith.maximumf %8, %9 : vector<16x128xf32>
    %11 = arith.truncf %10 : vector<16x128xf32> to vector<16x128xbf16>
    %cst_8 = arith.constant dense<0.000000e+00> : vector<16x128xf32>
    %12 = tpu.matmul %11, %3, %cst_8 {dimension_numbers = #tpu.dot_dimension_numbers<[1], [0], [0], [1], [0, 0, 1, 1], [], []>} : vector<16x128xbf16>, vector<128x128xbf16>, vector<16x128xf32> -> vector<16x128xf32>
    %c1 = arith.constant 1 : index
    %c0_9 = arith.constant 0 : index
    %13 = vector.load %arg3[%c1, %c0_9] : memref<3x128xf32, #tpu.memory_space<vmem>>, vector<1x128xf32>
    %14 = vector.broadcast %13 : vector<1x128xf32> to vector<16x128xf32>
    %15 = arith.addf %12, %14 : vector<16x128xf32>
    %cst_10 = arith.constant 0.000000e+00 : f32
    %16 = vector.broadcast %cst_10 : f32 to vector<16x128xf32>
    %17 = arith.maximumf %15, %16 : vector<16x128xf32>
    %18 = arith.truncf %17 : vector<16x128xf32> to vector<16x128xbf16>
    %cst_11 = arith.constant dense<0.000000e+00> : vector<16x128xf32>
    %19 = tpu.matmul %18, %4, %cst_11 {dimension_numbers = #tpu.dot_dimension_numbers<[1], [0], [0], [1], [0, 0, 1, 1], [], []>} : vector<16x128xbf16>, vector<128x128xbf16>, vector<16x128xf32> -> vector<16x128xf32>
    %c2 = arith.constant 2 : index
    %c0_12 = arith.constant 0 : index
    %20 = vector.load %arg3[%c2, %c0_12] : memref<3x128xf32, #tpu.memory_space<vmem>>, vector<1x128xf32>
    %21 = vector.broadcast %20 : vector<1x128xf32> to vector<16x128xf32>
    %22 = arith.addf %19, %21 : vector<16x128xf32>
    %23 = arith.truncf %22 : vector<16x128xf32> to vector<16x128xbf16>
    %c0_13 = arith.constant 0 : index
    %c0_14 = arith.constant 0 : index
    %24 = vector.load %arg4[%c0_13, %c0_14] : memref<16x128xbf16, #tpu.memory_space<vmem>>, vector<16x128xbf16>
    tpu.vector_store %arg4[%c0_13, %c0_14], %23 {strides = array<i32>} : memref<16x128xbf16, #tpu.memory_space<vmem>>, vector<16x128xbf16>,
    return
  }
  func.func @transform_0(%arg0: i32) -> (i32, i32) {
    %c0_i32 = arith.constant 0 : i32
    %c0_i32_0 = arith.constant 0 : i32
    return %arg0, %c0_i32 : i32, i32
  }
  func.func @transform_1(%arg0: i32) -> (i32, i32) {
    %c0_i32 = arith.constant 0 : i32
    %c0_i32_0 = arith.constant 0 : i32
    %c0_i32_1 = arith.constant 0 : i32
    return %c0_i32, %c0_i32_0 : i32, i32
  }
  func.func @transform_2(%arg0: i32) -> (i32, i32) {
    %c0_i32 = arith.constant 0 : i32
    %c0_i32_0 = arith.constant 0 : i32
    %c0_i32_1 = arith.constant 0 : i32
    return %c0_i32, %c0_i32_0 : i32, i32
  }
  func.func @transform_3(%arg0: i32) -> (i32, i32) {
    %c0_i32 = arith.constant 0 : i32
    %c0_i32_0 = arith.constant 0 : i32
    return %arg0, %c0_i32 : i32, i32
  }
}

</mosaic_0001>

<llo_original>
// kernel: tpu_custom_call.1
$region0: #{tpu_custom_call.1}
  #allocation0 [shape = 'u32[]', space=smem, size = 0x4, offset = 0x4, fixed_abs, tag = 'smem constant byte address 0x4 - core index']
  #allocation1 [shape = 'u32[72,128]{1,0:T(1,128)}', space=vmem, size = 0x9000, scoped, tag = 'internal scratch']
  %s0 = inlined_call_operand.hbm [shape: f32[8,16], index: 0, kind: input, shape index: {}]
  %s1 = inlined_call_operand.hbm [shape: bf16[272,128], index: 1, kind: input, shape index: {}]
  %s2 = inlined_call_operand.hbm [shape: f32[3,128], index: 2, kind: input, shape index: {}]
  %s3 = inlined_call_operand.hbm [shape: bf16[8,128], index: 3, kind: output, shape index: {}]
  %s4 = sld [smem:[#allocation0]]
  $region34: #{tpu_custom_call.1} parent=0
    _
  %s6 = ssub.s32 1, %s4
  %s7 = scalar_select 0, %s6, %s4
  $region1: #{tpu_custom_call.1} parent=0
    #allocation2 [shape = 'u8[8192]{0}', space=vmem, size = 0x2000, scoped, tag = 'input window, operand 0, single buffered']
    #allocation3 [shape = 's32[1]{0}', space=sflag, size = 0x4, scoped, tag = 'scoped memory for tpu_custom_call.1']
    #allocation4 [shape = 's32[1]{0}', space=sflag, size = 0x4, scoped, tag = 'scoped memory for tpu_custom_call.1']
    #allocation5 [shape = 'u8[69632]{0}', space=vmem, size = 0x11000, scoped, tag = 'input window, operand 1, single buffered']
    #allocation6 [shape = 's32[1]{0}', space=sflag, size = 0x4, scoped, tag = 'scoped memory for tpu_custom_call.1']
    #allocation7 [shape = 'u8[2048]{0}', space=vmem, size = 0x800, scoped, tag = 'input window, operand 2, single buffered']
    #allocation8 [shape = 'u8[4096]{0}', space=vmem, size = 0x1000, scoped, tag = 'output window, operand 0, single buffered']
    %8 = vsyncpa [#allocation3], 0
    %9 = vsyncpa [#allocation6], 0
    %10 = vsyncpa [#allocation4], 0
    // Predicated region
    $region2: #{tpu_custom_call.1} parent=1 // pred_check
      _
    $region3: #{tpu_custom_call.1} parent=1 // pred_check_branch
      %12 = sbr.rel (0) target = $region5
    $region4: #{tpu_custom_call.1} parent=1 // pred_region
      %14 = vsyncadd [#allocation3], 128
      %s15 = sshll.u32 %s0, 4
      %s16 = int_to_ptr.hbm [resolvable:$true] %s15
      %s17 = sshll.u32 [#allocation2], 4
      %s18 = int_to_ptr.vmem [resolvable:$true] %s17
      %23 = dma.hbm_to_vmem [thread:$0]  %s16, 128, %s18, [#allocation3], 128, 128, 8
    $region5: #{tpu_custom_call.1} parent=1 // pred_fallthru
      _
    // Predicated region
    $region6: #{tpu_custom_call.1} parent=1 // pred_check
      _
    $region7: #{tpu_custom_call.1} parent=1 // pred_check_branch
      %25 = sbr.rel (0) target = $region9
    $region8: #{tpu_custom_call.1} parent=1 // pred_region
      %27 = vsyncadd [#allocation6], 0
      %s28 = sshll.u32 %s1, 4
      %s29 = int_to_ptr.hbm [resolvable:$true] %s28
      %s30 = sshll.u32 [#allocation5], 4
      %s31 = int_to_ptr.vmem [resolvable:$true] %s30
      %36 = dma.hbm_to_vmem [thread:$0]  %s29, 2176, %s31, [#allocation6], 64, 64, 4
    $region9: #{tpu_custom_call.1} parent=1 // pred_fallthru
      _
    // Predicated region
    $region10: #{tpu_custom_call.1} parent=1 // pred_check
      _
    $region11: #{tpu_custom_call.1} parent=1 // pred_check_branch
      %38 = sbr.rel (0) target = $region13
    $region12: #{tpu_custom_call.1} parent=1 // pred_region
      %40 = vsyncadd [#allocation6], 0
      %s42 = sshll.u32 %s2, 4
      %s43 = int_to_ptr.hbm [resolvable:$true] %s42
      %s44 = sshll.u32 [#allocation7], 4
      %s45 = int_to_ptr.vmem [resolvable:$true] %s44
      %47 = dma.hbm_to_vmem [thread:$0]  %s43, 64, %s45, [#allocation6]
    $region13: #{tpu_custom_call.1} parent=1 // pred_fallthru
      _
    // Predicated region
    $region14: #{tpu_custom_call.1} parent=1 // pred_check
      _
    $region15: #{tpu_custom_call.1} parent=1 // pred_check_branch
      %49 = sbr.rel (0) target = $region17
    $region16: #{tpu_custom_call.1} parent=1 // pred_region
      %51 = dma.done [#allocation3], 256
    $region17: #{tpu_custom_call.1} parent=1 // pred_fallthru
      _
    // Predicated region
    $region18: #{tpu_custom_call.1} parent=1 // pred_check
      _
    $region19: #{tpu_custom_call.1} parent=1 // pred_check_branch
      %53 = sbr.rel (0) target = $region21
    $region20: #{tpu_custom_call.1} parent=1 // pred_region
      %55 = dma.done [#allocation6], 2176
    $region21: #{tpu_custom_call.1} parent=1 // pred_fallthru
      _
    // Predicated region
    $region22: #{tpu_custom_call.1} parent=1 // pred_check
      _
    $region23: #{tpu_custom_call.1} parent=1 // pred_check_branch
      %57 = sbr.rel (0) target = $region25
    $region24: #{tpu_custom_call.1} parent=1 // pred_region
      %59 = dma.done [#allocation6], 64
    $region25: #{tpu_custom_call.1} parent=1 // pred_fallthru
      _
    %v61 = vld [vmem:[#allocation2] sm:$0xff]
    %v62 = vld [vmem:[#allocation2 + $0x8] sm:$0xff]
    %v63 = vpack.c.bf16 %v62, %v61
    %v64 = vld [vmem:[#allocation5] sm:$0xf]
    %v65 = vld [vmem:[#allocation5 + $0x4] sm:$0xf]
    %v66 = vld [vmem:[#allocation5 + $0x8] sm:$0xf]
    %v67 = vld [vmem:[#allocation5 + $0xc] sm:$0xf]
    %v68 = vld [vmem:[#allocation5 + $0x10] sm:$0xf]
    %v69 = vld [vmem:[#allocation5 + $0x14] sm:$0xf]
    %v70 = vld [vmem:[#allocation5 + $0x18] sm:$0xf]
    %v71 = vld [vmem:[#allocation5 + $0x1c] sm:$0xf]
    %v72 = vld [vmem:[#allocation5 + $0x20] sm:$0xf]
    %v73 = vld [vmem:[#allocation5 + $0x24] sm:$0xf]
    %v74 = vld [vmem:[#allocation5 + $0x28] sm:$0xf]
    %v75 = vld [vmem:[#allocation5 + $0x2c] sm:$0xf]
    %v76 = vld [vmem:[#allocation5 + $0x30] sm:$0xf]
    %v77 = vld [vmem:[#allocation5 + $0x34] sm:$0xf]
    %v78 = vld [vmem:[#allocation5 + $0x38] sm:$0xf]
    %v79 = vld [vmem:[#allocation5 + $0x3c] sm:$0xf]
    %v80 = vld [vmem:[#allocation5 + $0x40] sm:$0xf]
    %v81 = vld [vmem:[#allocation5 + $0x44] sm:$0xf]
    %v82 = vld [vmem:[#allocation5 + $0x48] sm:$0xf]
    %v83 = vld [vmem:[#allocation5 + $0x4c] sm:$0xf]
    %v84 = vld [vmem:[#allocation5 + $0x50] sm:$0xf]
    %v85 = vld [vmem:[#allocation5 + $0x54] sm:$0xf]
    %v86 = vld [vmem:[#allocation5 + $0x58] sm:$0xf]
    %v87 = vld [vmem:[#allocation5 + $0x5c] sm:$0xf]
    %v88 = vld [vmem:[#allocation5 + $0x60] sm:$0xf]
    %v89 = vld [vmem:[#allocation5 + $0x64] sm:$0xf]
    %v90 = vld [vmem:[#allocation5 + $0x68] sm:$0xf]
    %v91 = vld [vmem:[#allocation5 + $0x6c] sm:$0xf]
    %v92 = vld [vmem:[#allocation5 + $0x70] sm:$0xf]
    %v93 = vld [vmem:[#allocation5 + $0x74] sm:$0xf]
    %v94 = vld [vmem:[#allocation5 + $0x78] sm:$0xf]
    %v95 = vld [vmem:[#allocation5 + $0x7c] sm:$0xf]
    %v96 = vld [vmem:[#allocation5 + $0x80] sm:$0xf]
    %v97 = vld [vmem:[#allocation5 + $0x84] sm:$0xf]
    %v98 = vld [vmem:[#allocation7] sm:$0x1]
    %v99 = vperm.slane %v98, 0
    %v102 = vunpack.c.l.b16 %v64
    %v103 = vunpack.c.l.b16 %v65
    %v104 = vpack.c.b16 %v103, %v102
    %vm106 = vcmask 130048
    %v108 = vsel %vm106, %v63, 0
    %110 = vmatpush.bf16.msra.mxu0 0
    %111 = vmatpush.bf16.msra.mxu0 0
    %112 = vmatpush.bf16.msra.mxu0 0
    %113 = vmatpush.bf16.msra.mxu0 0
    %114 = vmatpush.bf16.msra.mxu0 0
    %115 = vmatpush.bf16.msra.mxu0 0
    %116 = vmatpush.bf16.msra.mxu0 0
    %117 = vmatpush.bf16.msra.mxu0 %v104
    %118 = vmatmul.bf16.gmra.mxu0 %v108
    %v119 = vpop.f32.mrf.mxu0
    %v120 = vadd.f32 %v99, %v119
    %v121 = vpop.f32.mrf.mxu0
    %v122 = vadd.f32 %v99, %v121
    %123 = vdwg.mxu0
    %v124 = vmax.f32 %v120, 0.0
    %v125 = vmax.f32 %v122, 0.0
    %v126 = vpack.c.bf16 %v125, %v124
    %v127 = vld [vmem:[#allocation7 + $0x1] sm:$0x1]
    %v128 = vperm.slane %v127, 0
    %v145 = vunpack.c.l.b16 %v66
    %v146 = vunpack.c.l.b16 %v67
    %v147 = vunpack.c.l.b16 %v68
    %v148 = vunpack.c.l.b16 %v69
    %v149 = vunpack.c.l.b16 %v70
    %v150 = vunpack.c.l.b16 %v71
    %v151 = vunpack.c.l.b16 %v72
    %v152 = vunpack.c.l.b16 %v73
    %v153 = vunpack.c.l.b16 %v74
    %v154 = vunpack.c.l.b16 %v75
    %v155 = vunpack.c.l.b16 %v76
    %v156 = vunpack.c.l.b16 %v77
    %v157 = vunpack.c.l.b16 %v78
    %v158 = vunpack.c.l.b16 %v79
    %v159 = vunpack.c.l.b16 %v80
    %v160 = vunpack.c.l.b16 %v81
    %v161 = vpack.c.b16 %v146, %v145
    %v162 = vpack.c.b16 %v148, %v147
    %v163 = vpack.c.b16 %v150, %v149
    %v164 = vpack.c.b16 %v152, %v151
    %v165 = vpack.c.b16 %v154, %v153
    %v166 = vpack.c.b16 %v156, %v155
    %v167 = vpack.c.b16 %v158, %v157
    %v168 = vpack.c.b16 %v160, %v159
    %177 = vmatpush.bf16.msra.mxu0 %v168
    %178 = vmatpush.bf16.msra.mxu0 %v167
    %179 = vmatpush.bf16.msra.mxu0 %v166
    %180 = vmatpush.bf16.msra.mxu0 %v165
    %181 = vmatpush.bf16.msra.mxu0 %v164
    %182 = vmatpush.bf16.msra.mxu0 %v163
    %183 = vmatpush.bf16.msra.mxu0 %v162
    %184 = vmatpush.bf16.msra.mxu0 %v161
    %185 = vmatmul.bf16.gmra.mxu0 %v126
    %v186 = vpop.f32.mrf.mxu0
    %v187 = vadd.f32 %v128, %v186
    %v188 = vpop.f32.mrf.mxu0
    %v189 = vadd.f32 %v128, %v188
    %190 = vdwg.mxu0
    %v191 = vmax.f32 %v187, 0.0
    %v192 = vmax.f32 %v189, 0.0
    %v193 = vpack.c.bf16 %v192, %v191
    %v194 = vld [vmem:[#allocation7 + $0x2] sm:$0x1]
    %v195 = vperm.slane %v194, 0
    %v212 = vunpack.c.l.b16 %v82
    %v213 = vunpack.c.l.b16 %v83
    %v214 = vunpack.c.l.b16 %v84
    %v215 = vunpack.c.l.b16 %v85
    %v216 = vunpack.c.l.b16 %v86
    %v217 = vunpack.c.l.b16 %v87
    %v218 = vunpack.c.l.b16 %v88
    %v219 = vunpack.c.l.b16 %v89
    %v220 = vunpack.c.l.b16 %v90
    %v221 = vunpack.c.l.b16 %v91
    %v222 = vunpack.c.l.b16 %v92
    %v223 = vunpack.c.l.b16 %v93
    %v224 = vunpack.c.l.b16 %v94
    %v225 = vunpack.c.l.b16 %v95
    %v226 = vunpack.c.l.b16 %v96
    %v227 = vunpack.c.l.b16 %v97
    %v228 = vpack.c.b16 %v213, %v212
    %v229 = vpack.c.b16 %v215, %v214
    %v230 = vpack.c.b16 %v217, %v216
    %v231 = vpack.c.b16 %v219, %v218
    %v232 = vpack.c.b16 %v221, %v220
    %v233 = vpack.c.b16 %v223, %v222
    %v234 = vpack.c.b16 %v225, %v224
    %v235 = vpack.c.b16 %v227, %v226
    %244 = vmatpush.bf16.msra.mxu0 %v235
    %245 = vmatpush.bf16.msra.mxu0 %v234
    %246 = vmatpush.bf16.msra.mxu0 %v233
    %247 = vmatpush.bf16.msra.mxu0 %v232
    %248 = vmatpush.bf16.msra.mxu0 %v231
    %249 = vmatpush.bf16.msra.mxu0 %v230
    %250 = vmatpush.bf16.msra.mxu0 %v229
    %251 = vmatpush.bf16.msra.mxu0 %v228
    %252 = vmatmul.bf16.gmra.mxu0 %v193
    %v253 = vpop.f32.mrf.mxu0
    %v254 = vadd.f32 %v195, %v253
    %v255 = vpop.f32.mrf.mxu0
    %v256 = vadd.f32 %v195, %v255
    %257 = vdwg.mxu0
    %v258 = vpack.c.bf16 %v254, %v254
    %v259 = vpack.c.bf16 %v256, %v256
    %260 = vst [vmem:[#allocation8] sm:$0xf] %v258
    %261 = vst [vmem:[#allocation8 + $0x4] sm:$0xf] %v259
    // Predicated region
    $region26: #{tpu_custom_call.1} parent=1 // pred_check
      _
    $region27: #{tpu_custom_call.1} parent=1 // pred_check_branch
      %263 = sbr.rel (0) target = $region29
    $region28: #{tpu_custom_call.1} parent=1 // pred_region
      %265 = vsyncadd [#allocation4], 64
      %s266 = sshll.u32 [#allocation8], 4
      %s267 = int_to_ptr.vmem [resolvable:$true] %s266
      %s268 = sshll.u32 %s3, 4
      %s269 = int_to_ptr.hbm [resolvable:$true] %s268
      %274 = dma.vmem_to_hbm [thread:$0]  %s267, 64, %s269, [#allocation4], 64, 64, 4
    $region29: #{tpu_custom_call.1} parent=1 // pred_fallthru
      _
    // Predicated region
    $region30: #{tpu_custom_call.1} parent=1 // pred_check
      _
    $region31: #{tpu_custom_call.1} parent=1 // pred_check_branch
      %276 = sbr.rel (0) target = $region33
    $region32: #{tpu_custom_call.1} parent=1 // pred_region
      %278 = dma.done [#allocation4], 128
    $region33: #{tpu_custom_call.1} parent=1 // pred_fallthru
      _
    %279 = vsyncpa [#allocation3], 1
    %280 = vsyncpa [#allocation6], 1
    %281 = vsyncpa [#allocation4], 1

</llo_original>
